<compile_context>
chip_gen: v6e
topology: v6e:2x2x1
jax: 0.10.0
libtpu: 0.0.40
codegen_flags: <defaults>
</compile_context>

<pallas_src>
import functools

import numpy as np

import jax
import jax.numpy as jnp
from jax.experimental import pallas as pl
from jax.experimental.pallas import tpu as pltpu


# (spatial H == W, Cin, Cout, maxpool?)
_LAYERS = (
    (24, 1, 3, True),
    (12, 3, 6, True),
    (6, 6, 12, True),
    (3, 12, 24, False),
)

_LANE = 128          # padded lane width of each conv-tap output (valid width = 72)
_TARGET_BLOCK = 64   # images per grid step for large batches (multiple of 8)


# ------------------------- roll convention probe --------------------------- #

_ROLL_DOWN_PLUS1 = None


def _roll_down_is_plus1():
    """True iff pltpu.roll follows np.roll semantics (out[i] = in[i - shift]).

    Tiny one-time probe kernel so the conv row-shift direction is always correct
    regardless of the rotate convention of the installed Mosaic lowering.
    """
    global _ROLL_DOWN_PLUS1
    if _ROLL_DOWN_PLUS1 is None:
        def probe(x_ref, o_ref):
            o_ref[...] = pltpu.roll(x_ref[...], 1, 0)

        x = jnp.arange(8 * 128, dtype=jnp.float32).reshape(8, 128)
        out = pl.pallas_call(
            probe, out_shape=jax.ShapeDtypeStruct((8, 128), jnp.float32))(x)
        _ROLL_DOWN_PLUS1 = bool(out[1, 0] == x[0, 0])
    return _ROLL_DOWN_PLUS1


# ------------------------------ Pallas kernel ------------------------------ #

def _cnn_kernel(nb, down1, *refs):
    """Whole-network forward for one batch block; everything VMEM-resident."""
    *prm, out_ref, pool_scr, fc_scr = refs
    x_ref, prm = prm[0], prm[1:]
    it = iter(prm)

    def dot(a, b):
        return jnp.dot(a, b, preferred_element_type=jnp.float32)

    def silu(v):
        # Numerically-stable logistic on the EUP (exp + approx reciprocal).
        e = jnp.exp(-jnp.abs(v))                       # always in (0, 1]
        r = pl.reciprocal(1.0 + e, approx=True)
        sig = jnp.where(v >= 0, r, e * r)
        return v * sig

    x = x_ref[...]                                      # (nb*24, 24) bf16

    for h, _cin, cout, pool in _LAYERS:
        rows = nb * h
        m_cat, b_row = next(it), next(it)
        # One fused bf16 MXU matmul for all 3 vertical taps; result lanes
        # [0:128) = tap i-1, [128:256) = tap i, [256:384) = tap i+1 (72 valid).
        t = dot(x.astype(jnp.bfloat16), m_cat[...])     # (rows, 384) f32
        t_m1 = t[:, 0:_LANE]
        t_0 = t[:, _LANE:2 * _LANE]
        t_p1 = t[:, 2 * _LANE:3 * _LANE]
        # Row shifts on the XLU + zero-pad border masks on the VPU
        # (replaces the old O(nb^2) shift-matrix GEMMs).
        d_amt = 1 if down1 else rows - 1                # out[i] = in[i-1]
        u_amt = rows - 1 if down1 else 1                # out[i] = in[i+1]
        row_i = jax.lax.broadcasted_iota(jnp.int32, (rows, _LANE), 0) % h
        down = jnp.where(row_i == 0, 0.0, pltpu.roll(t_m1, d_amt, 0))
        up = jnp.where(row_i == h - 1, 0.0, pltpu.roll(t_p1, u_amt, 0))
        y = t_0 + down + up + b_row[...]                # conv bias + folded BatchNorm2d
        act = silu(y)                                   # Dropout2d == identity (eval)

        if pool:                                        # MaxPool(2, 2)
            p_e, p_o = next(it), next(it)
            ab = act.astype(jnp.bfloat16)
            # Width pooling via tiny bf16 0/1 lane-selection matmuls.
            col_max = jnp.maximum(dot(ab, p_e[...]), dot(ab, p_o[...]))   # (rows, 36)
            # Height pooling via even/odd sublane selection from VMEM scratch.
            pool_scr[pl.ds(0, rows), :] = col_max
            even = pool_scr[pl.ds(0, rows // 2, stride=2), :]
            odd = pool_scr[pl.ds(1, rows // 2, stride=2), :]
            x = jnp.maximum(even, odd)                  # (rows//2, 36)
        else:
            x = act                                     # (nb*3, 128), lanes >= 72 are 0

    # Flatten (PyTorch NCHW order) + Linear(216, 216): three stride-3 sublane reads
    # feed three bf16 GEMMs with column-permuted fc1 weights (no transpose/reshape).
    w0, w1, w2, b_fc1, w_fc2, b_fc2 = (next(it) for _ in range(6))
    fc_scr[...] = x                                     # (nb*3, 128) f32
    z = b_fc1[...]
    for i, w in enumerate((w0, w1, w2)):
        rows_i = fc_scr[pl.ds(i, nb, stride=3), :]      # (nb, 128): rows with fixed i
        z = z + dot(rows_i.astype(jnp.bfloat16), w[...])
    z = silu(z)
    # Linear(216, 10) with BatchNorm1d(eval) pre-folded; output padded to 128 lanes.
    out = dot(z.astype(jnp.bfloat16), w_fc2[...]) + b_fc2[...]
    out_ref[...] = out.astype(out_ref.dtype)


# --------------------------- structural matrices --------------------------- #

def _pool_lane_mats(w, c):
    """Select even / odd column (width) positions, channel-interleaved layout."""
    half = (w // 2) * c
    p_e = np.zeros((w * c, half), np.float32)
    p_o = np.zeros((w * c, half), np.float32)
    jp = np.repeat(np.arange(w // 2), c)
    ch = np.tile(np.arange(c), w // 2)
    p_e[(2 * jp) * c + ch, jp * c + ch] = 1.0
    p_o[(2 * jp + 1) * c + ch, jp * c + ch] = 1.0
    return p_e, p_o


# ---------------------------- one-time weight pack -------------------------- #

def pack_params(params, eps=1e-5):
    """Fold BN, build fused banded conv / pooling / fc matrices (batch-independent)."""
    packed = []
    for li, (h, cin, cout, pool) in enumerate(_LAYERS, start=1):
        w = params[f"conv{li}_w"].astype(jnp.float32)          # (Cout, Cin, 3, 3)
        b = params[f"conv{li}_b"].astype(jnp.float32)
        bn = params[f"bn{li}"]
        scale = bn["gamma"] / jnp.sqrt(bn["var"] + eps)
        shift = bn["beta"] - bn["mean"] * scale
        w_eff = w * scale[:, None, None, None]                 # BN folded into conv
        b_eff = b * scale + shift

        # Banded indicator: band[jin, jout, kj] = 1 iff jin == jout + kj - 1.
        band = np.zeros((h, h, 3), np.float32)
        for kj in range(3):
            jout = np.arange(h)
            jin = jout + kj - 1
            ok = (jin >= 0) & (jin < h)
            band[jin[ok], jout[ok], kj] = 1.0
        band = jnp.asarray(band)

        # Fused conv weight: the 3 vertical taps side by side, each padded to 128 lanes.
        m_cat = jnp.zeros((h * cin, 3 * _LANE), jnp.float32)
        for idx, di in enumerate((-1, 0, 1)):
            wd = w_eff[:, :, di + 1, :]                        # (Cout, Cin, 3=kj)
            m = jnp.einsum("abk,oik->aibo", band, wd).reshape(h * cin, h * cout)
            m_cat = m_cat.at[:, idx * _LANE: idx * _LANE + h * cout].set(m)
        packed.append(m_cat.astype(jnp.bfloat16))
        b_row = jnp.zeros((1, _LANE), jnp.float32).at[0, :h * cout].set(jnp.tile(b_eff, h))
        packed.append(b_row)
        if pool:
            p_e, p_o = _pool_lane_mats(h, cout)                # (72, 36) each
            pe = np.zeros((_LANE, (h // 2) * cout), np.float32)
            po = np.zeros((_LANE, (h // 2) * cout), np.float32)
            pe[:h * cout] = p_e
            po[:h * cout] = p_o
            packed.append(jnp.asarray(pe, dtype=jnp.bfloat16))
            packed.append(jnp.asarray(po, dtype=jnp.bfloat16))

    # fc1: columns permuted so each i-slice multiplies the (j*24 + c) row layout.
    w1 = params["fc1_w"].astype(jnp.float32)                   # (out=216, in=216)
    w1t = w1.T.reshape(24, 3, 3, 216)                          # (c, i, j, out)
    for i in range(3):
        wi = jnp.transpose(w1t[:, i, :, :], (1, 0, 2)).reshape(72, 216)  # (j*24+c, out)
        wi = jnp.zeros((_LANE, 216), jnp.float32).at[:72, :].set(wi)
        packed.append(wi.astype(jnp.bfloat16))
    packed.append(params["fc1_b"].astype(jnp.float32)[None, :])          # (1, 216)

    # fc2 with BatchNorm1d(eval) folded in; output padded to 128 lanes.
    bnf = params["bn_fc"]
    scale = bnf["gamma"] / jnp.sqrt(bnf["var"] + eps)
    shift = bnf["beta"] - bnf["mean"] * scale
    w2 = params["fc2_w"].astype(jnp.float32)                   # (10, 216)
    w2p = jnp.zeros((216, _LANE), jnp.float32).at[:, :10].set(w2.T * scale[:, None])
    packed.append(w2p.astype(jnp.bfloat16))
    b2 = params["fc2_b"].astype(jnp.float32) + shift @ w2.T
    packed.append(jnp.zeros((1, _LANE), jnp.float32).at[0, :10].set(b2))
    return tuple(packed)


# ------------------------------- forward pass ------------------------------ #

def _choose_block(n):
    """Images per grid step (multiple of 8) and grid length (always >= 2 steps)."""
    if n >= 2 * _TARGET_BLOCK:
        nb = _TARGET_BLOCK
    else:
        nb = min(_TARGET_BLOCK, max(8, ((n + 1) // 2 + 7) // 8 * 8))
    blocks = max(2, -(-n // nb))          # >= 2 so both v7x TensorCores get work
    return nb, blocks


@functools.partial(jax.jit, static_argnames=("nb", "blocks", "down1"))
def _forward_impl(x_nchw, packed, *, nb, blocks, down1):
    n = x_nchw.shape[0]
    pad_n = nb * blocks
    x = x_nchw.reshape(n, 24, 24).astype(jnp.bfloat16)
    x = jnp.pad(x, ((0, pad_n - n), (0, 0), (0, 0)))          # zero-pad batch
    x2d = x.reshape(pad_n * 24, 24)                           # (N*H, W*Cin), Cin=1

    in_specs = [pl.BlockSpec((nb * 24, 24), lambda i: (i, 0))]
    in_specs += [pl.BlockSpec(p.shape, lambda i: (0, 0)) for p in packed]

    return pl.pallas_call(
        functools.partial(_cnn_kernel, nb, down1),
        out_shape=jax.ShapeDtypeStruct((pad_n, _LANE), jnp.float32),
        grid=(blocks,),
        in_specs=in_specs,
        out_specs=pl.BlockSpec((nb, _LANE), lambda i: (i, 0)),
        scratch_shapes=[
            pltpu.VMEM((nb * 24, 36), jnp.float32),           # maxpool row-selection
            pltpu.VMEM((nb * 3, _LANE), jnp.float32),         # flatten row-selection
        ],
        compiler_params=pltpu.CompilerParams(
            dimension_semantics=("parallel",),
            vmem_limit_bytes=32 * 1024 * 1024),
    )(x2d, *packed)


def forward(x_nchw, packed):
    n = x_nchw.shape[0]
    nb, blocks = _choose_block(n)
    out = _forward_impl(x_nchw, packed, nb=nb, blocks=blocks,
                        down1=_roll_down_is_plus1())
    return out[:n, :10]


# ------------------------------- parameters -------------------------------- #

def _bn_defaults(c):
    return dict(gamma=jnp.ones((c,), jnp.float32),
                beta=jnp.zeros((c,), jnp.float32),
                mean=jnp.zeros((c,), jnp.float32),
                var=jnp.ones((c,), jnp.float32))


def init_params(key):
    keys = jax.random.split(key, 16)
    ki = iter(range(16))

    def kaiming_conv(k, shape):            # (O, I, kh, kw), fan_in = I*kh*kw
        fan_in = shape[1] * shape[2] * shape[3]
        return jax.random.normal(k, shape, jnp.float32) * jnp.sqrt(2.0 / fan_in)

    def xavier_linear(k, shape):           # (out, in)
        fan_out, fan_in = shape
        return jax.random.normal(k, shape, jnp.float32) * jnp.sqrt(2.0 / (fan_in + fan_out))

    def uniform_bias(k, n, fan_in):
        bound = 1.0 / jnp.sqrt(float(fan_in))
        return jax.random.uniform(k, (n,), jnp.float32, -bound, bound)

    p = {}
    conv_shapes = [(3, 1, 3, 3), (6, 3, 3, 3), (12, 6, 3, 3), (24, 12, 3, 3)]
    for li, shp in enumerate(conv_shapes, start=1):
        p[f"conv{li}_w"] = kaiming_conv(keys[next(ki)], shp)
        p[f"conv{li}_b"] = uniform_bias(keys[next(ki)], shp[0], shp[1] * 9)
        p[f"bn{li}"] = _bn_defaults(shp[0])

    p["fc1_w"] = xavier_linear(keys[next(ki)], (216, 216))
    p["fc1_b"] = uniform_bias(keys[next(ki)], 216, 216)
    p["bn_fc"] = _bn_defaults(216)
    p["fc2_w"] = xavier_linear(keys[next(ki)], (10, 216))
    p["fc2_b"] = uniform_bias(keys[next(ki)], 10, 216)
    return p


# -------------------------- plain-JAX f32 reference ------------------------ #

def _reference_forward(params, x_nchw, eps=1e-5):
    x = jnp.transpose(x_nchw, (0, 2, 3, 1))                    # NCHW -> NHWC
    for li, (h, cin, cout, pool) in enumerate(_LAYERS, start=1):
        w = params[f"conv{li}_w"]
        b = params[f"conv{li}_b"]
        bn = params[f"bn{li}"]
        n = x.shape[0]
        xp = jnp.pad(x, ((0, 0), (1, 1), (1, 1), (0, 0)))
        cols = [xp[:, ki:ki + h, kj:kj + h, :] for ki in range(3) for kj in range(3)]
        patches = jnp.stack(cols, axis=3).reshape(n * h * h, 9 * cin)
        w2d = jnp.transpose(w, (2, 3, 1, 0)).reshape(9 * cin, cout)
        y = patches @ w2d + b
        scale = bn["gamma"] / jnp.sqrt(bn["var"] + eps)
        shift = bn["beta"] - bn["mean"] * scale
        y = y * scale + shift
        y = y * jax.nn.sigmoid(y)
        y = y.reshape(n, h, h, cout)
        if pool:
            y = y.reshape(n, h // 2, 2, h // 2, 2, cout).max(axis=(2, 4))
        x = y
    n = x.shape[0]
    flat = jnp.transpose(x, (0, 3, 1, 2)).reshape(n, 216)      # PyTorch NCHW flatten
    z = flat @ params["fc1_w"].T + params["fc1_b"]
    z = z * jax.nn.sigmoid(z)
    bnf = params["bn_fc"]
    scale = bnf["gamma"] / jnp.sqrt(bnf["var"] + eps)
    shift = bnf["beta"] - bnf["mean"] * scale
    z = z * scale + shift
    return z @ params["fc2_w"].T + params["fc2_b"]


# ----------------------------------- main ----------------------------------- #

if __name__ == "__main__":
    key = jax.random.PRNGKey(0)
    pkey, xkey = jax.random.split(key)
    params = init_params(pkey)

    # Input implied by the module: Linear(216 = 24*3*3) after three MaxPool(2,2)
    # stages on a 1-channel image -> (N, 1, 24, 24).
    x = jax.random.normal(xkey, (2, 1, 24, 24), jnp.float32)

    packed = pack_params(params)
    out = jax.block_until_ready(forward(x, packed))

    assert out.shape == (2, 10), out.shape
    assert bool(jnp.all(jnp.isfinite(out)))

    # Correctness vs. a plain-JAX f32 reference of the PyTorch module (eval mode);
    # tolerance covers bf16 weight/activation casts and the approx reciprocal.
    ref = jax.block_until_ready(_reference_forward(params, x))
    np.testing.assert_allclose(np.asarray(out), np.asarray(ref), rtol=0.1, atol=0.1)

    print("KERNEL_OK")
</pallas_src>

<mosaic_0001>
module attributes {stable_mosaic.version = 11 : i64} {
  func.func @probe(%arg0: memref<8x128xf32, #tpu.memory_space<vmem>>, %arg1: memref<8x128xf32, #tpu.memory_space<vmem>>) attributes {dimension_semantics = [], scalar_prefetch = 0 : i64, scratch_operands = 0 : i64, tpu.core_type = #tpu.core_type<tc>} {
    %c0 = arith.constant 0 : index
    %c0_0 = arith.constant 0 : index
    %0 = vector.load %arg0[%c0, %c0_0] : memref<8x128xf32, #tpu.memory_space<vmem>>, vector<8x128xf32>
    %c1_i32 = arith.constant 1 : i32
    %1 = tpu.dynamic_rotate %0 by %c1_i32 dim 0 : vector<8x128xf32>, i32 -> vector<8x128xf32>
    %c0_1 = arith.constant 0 : index
    %c0_2 = arith.constant 0 : index
    %2 = vector.load %arg1[%c0_1, %c0_2] : memref<8x128xf32, #tpu.memory_space<vmem>>, vector<8x128xf32>
    tpu.vector_store %arg1[%c0_1, %c0_2], %1 {strides = array<i32>} : memref<8x128xf32, #tpu.memory_space<vmem>>, vector<8x128xf32>,
    return
  }
}

</mosaic_0001>

<llo_original>
// kernel: tpu_custom_call.1
$region0: #{tpu_custom_call.1}
  #allocation0 [shape = 'u32[]', space=smem, size = 0x4, offset = 0x4, fixed_abs, tag = 'smem constant byte address 0x4 - core index']
  #allocation1 [shape = 'u32[144,128]{1,0:T(1,128)}', space=vmem, size = 0x12000, scoped, tag = 'internal scratch']
  %s0 = inlined_call_operand.hbm [shape: f32[8,128], index: 0, kind: input, shape index: {}]
  %s1 = inlined_call_operand.hbm [shape: f32[8,128], index: 1, kind: output, shape index: {}]
  %s2 = sld [smem:[#allocation0]]
  $region18: #{tpu_custom_call.1} parent=0
    _
  %s4 = ssub.s32 1, %s2
  %s5 = scalar_select 0, %s4, %s2
  $region1: #{tpu_custom_call.1} parent=0
    #allocation2 [shape = 'u8[4096]{0}', space=vmem, size = 0x1000, scoped, tag = 'input window, operand 0, single buffered']
    #allocation3 [shape = 's32[1]{0}', space=sflag, size = 0x4, scoped, tag = 'scoped memory for tpu_custom_call.1']
    #allocation4 [shape = 's32[1]{0}', space=sflag, size = 0x4, scoped, tag = 'scoped memory for tpu_custom_call.1']
    #allocation5 [shape = 'u8[4096]{0}', space=vmem, size = 0x1000, scoped, tag = 'output window, operand 0, single buffered']
    %6 = vsyncpa [#allocation3], 0
    %7 = vsyncpa [#allocation4], 0
    // Predicated region
    $region2: #{tpu_custom_call.1} parent=1 // pred_check
      _
    $region3: #{tpu_custom_call.1} parent=1 // pred_check_branch
      %9 = sbr.rel (0) target = $region5
    $region4: #{tpu_custom_call.1} parent=1 // pred_region
      %s11 = ssub.s32 128, 128
      %12 = vsyncadd [#allocation3], %s11
      %s14 = sshll.u32 [#allocation2], 4
      %s15 = int_to_ptr.vmem [resolvable:$true] %s14
      %17 = dma.hbm_to_vmem [thread:$0]  %s0, 128, %s15, [#allocation3]
    $region5: #{tpu_custom_call.1} parent=1 // pred_fallthru
      _
    // Predicated region
    $region6: #{tpu_custom_call.1} parent=1 // pred_check
      _
    $region7: #{tpu_custom_call.1} parent=1 // pred_check_branch
      %19 = sbr.rel (0) target = $region9
    $region8: #{tpu_custom_call.1} parent=1 // pred_region
      %20 = dma.done [#allocation3], 128
    $region9: #{tpu_custom_call.1} parent=1 // pred_fallthru
      _
    %v21 = vld [vmem:[#allocation2] sm:$0xff]
    %v22 = vrot.slane %v21, 7
    %23 = vst [vmem:[#allocation5] sm:$0xff] %v22
    // Predicated region
    $region10: #{tpu_custom_call.1} parent=1 // pred_check
      _
    $region11: #{tpu_custom_call.1} parent=1 // pred_check_branch
      %25 = sbr.rel (0) target = $region13
    $region12: #{tpu_custom_call.1} parent=1 // pred_region
      %s27 = ssub.s32 128, 128
      %28 = vsyncadd [#allocation4], %s27
      %s30 = sshll.u32 [#allocation5], 4
      %s31 = int_to_ptr.vmem [resolvable:$true] %s30
      %33 = dma.vmem_to_hbm [thread:$0]  %s31, 128, %s1, [#allocation4]
    $region13: #{tpu_custom_call.1} parent=1 // pred_fallthru
      _
    // Predicated region
    $region14: #{tpu_custom_call.1} parent=1 // pred_check
      _
    $region15: #{tpu_custom_call.1} parent=1 // pred_check_branch
      %35 = sbr.rel (0) target = $region17
    $region16: #{tpu_custom_call.1} parent=1 // pred_region
      %36 = dma.done [#allocation4], 128
    $region17: #{tpu_custom_call.1} parent=1 // pred_fallthru
      _
    %37 = vsyncpa [#allocation3], 1
    %38 = vsyncpa [#allocation4], 1

</llo_original>
